<compile_context>
chip_gen: v7x
topology: tpu7x:2x2x1
jax: 0.10.0
libtpu: 0.0.40
codegen_flags: <defaults>
</compile_context>

<pallas_src>
import functools

import jax
import jax.numpy as jnp
import numpy as np
from jax.experimental import pallas as pl
from jax.experimental.pallas import tpu as pltpu

KS = 5          # conv kernel size
PAD = 2         # conv padding
C_OUT = 128     # conv output channels


def _cnn_kernel(cols_ref, wc_ref, bc_ref, fw_ref, fb_ref, o_ref, *, bt, L):
    # cols_ref: (bt*L, KS*E) bf16   im2col rows for one batch tile
    # wc_ref  : (KS*E, 128)  bf16   conv weights (grid-resident)
    # bc_ref  : (1, 128)     f32    conv bias
    # fw_ref  : (128, 128)   f32    fc weight, zero-padded to 128 output lanes
    # fb_ref  : (1, 128)     f32    fc bias, zero-padded
    # o_ref   : (bt, 128)    f32    padded logits (wrapper slices [:, :C])
    acc = jnp.dot(cols_ref[...], wc_ref[...],
                  preferred_element_type=jnp.float32)          # (bt*L, 128) MXU

    # AdaptiveMaxPool1d(1) == global max over the sequence. Per-channel bias and
    # ReLU commute with the max (bias constant over L, ReLU monotone), so apply
    # them after pooling on the small (bt, 128) f32 tile.
    pooled = jnp.max(acc.reshape(bt, L, C_OUT), axis=1)        # (bt, 128) f32
    feat = jnp.maximum(pooled + bc_ref[...], 0.0)              # f32 epilogue

    # Fused FC: tiny (bt,128)@(128,128) f32 matmul, lane-dense store.
    o_ref[...] = jnp.dot(feat, fw_ref[...],
                         preferred_element_type=jnp.float32) + fb_ref[...]


def _choose_batch_tile(B, batch_tile):
    if batch_tile is not None:
        return batch_tile
    bt = 128                         # M = bt*L = 2048 at L=16 (multiple of 256)
    # Keep >= 2 grid steps when the batch allows it (v7x: two TensorCores share
    # the 'parallel' axis), but never drop below 16 (M >= 256 per MXU pass).
    while bt > 16 and pl.cdiv(B, bt) < 2:
        bt //= 2
    return bt


@functools.partial(jax.jit, static_argnames=("batch_tile",))
def cnn_classifier_forward(tokens, emb_table, conv_w, conv_b, fc_w, fc_b,
                           *, batch_tile=None):
    """tokens: (B, L) int32 token ids. Returns (B, num_classes) f32 logits."""
    B, L = tokens.shape
    E = emb_table.shape[1]
    C = fc_w.shape[0]

    bt = _choose_batch_tile(B, batch_tile)
    B_pad = pl.cdiv(B, bt) * bt
    if B_pad != B:
        tokens = jnp.pad(tokens, ((0, B_pad - B), (0, 0)))     # pad rows -> token 0

    # TODO(synk): embedding gather stays in plain JAX (data-dependent row gather);
    # fusing it into the kernel would need per-row DMA from an HBM-resident table.
    # Under jit it fuses with the im2col below into one XLA region feeding the kernel.
    x = jnp.take(emb_table.astype(jnp.bfloat16), tokens, axis=0)       # (B_pad, L, E)

    # im2col in the wrapper (XLA): zero-pad the sequence and stack the 5 taps so
    # the kernel sees a single lane-dense 2D operand (no in-kernel relayouts).
    xp = jnp.pad(x, ((0, 0), (PAD, PAD), (0, 0)))                      # (B_pad, L+4, E)
    cols = jnp.concatenate([xp[:, k:k + L, :] for k in range(KS)], axis=-1)
    cols = cols.reshape(B_pad * L, KS * E)                             # (B_pad*L, KS*E) bf16

    # PyTorch Conv1d weight (C_OUT, E, KS) -> im2col layout (KS*E, C_OUT), bf16.
    wc = jnp.transpose(conv_w, (2, 1, 0)).reshape(KS * E, C_OUT).astype(jnp.bfloat16)
    bc = conv_b.reshape(1, C_OUT).astype(jnp.float32)

    # FC weight/bias zero-padded to 128 output lanes (unmasked 128-lane stores).
    fw_pad = jnp.zeros((C_OUT, 128), jnp.float32).at[:, :C].set(
        fc_w.astype(jnp.float32).T)
    fb_pad = jnp.zeros((1, 128), jnp.float32).at[0, :C].set(
        fc_b.astype(jnp.float32))

    kernel = functools.partial(_cnn_kernel, bt=bt, L=L)
    logits_pad = pl.pallas_call(
        kernel,
        out_shape=jax.ShapeDtypeStruct((B_pad, 128), jnp.float32),
        grid=(B_pad // bt,),
        in_specs=[
            pl.BlockSpec((bt * L, KS * E), lambda b: (b, 0)),    # im2col batch tile
            pl.BlockSpec((KS * E, C_OUT), lambda b: (0, 0)),     # conv W resident
            pl.BlockSpec((1, C_OUT), lambda b: (0, 0)),          # conv bias
            pl.BlockSpec((C_OUT, 128), lambda b: (0, 0)),        # fc W resident
            pl.BlockSpec((1, 128), lambda b: (0, 0)),            # fc bias
        ],
        out_specs=pl.BlockSpec((bt, 128), lambda b: (b, 0)),     # lane-dense output
        compiler_params=pltpu.CompilerParams(
            dimension_semantics=("parallel",),        # megacore-shardable on v7x
            vmem_limit_bytes=32 * 1024 * 1024),       # per-step usage << limit
    )(cols, wc, bc, fw_pad, fb_pad)

    return logits_pad[:B, :C]


def _reference_forward(tokens, emb_table, conv_w, conv_b, fc_w, fc_b):
    """Pure-JAX f32 reference matching PyTorch semantics."""
    x = jnp.take(emb_table, tokens, axis=0)                    # (B, L, E)
    x_pad = jnp.pad(x, ((0, 0), (PAD, PAD), (0, 0)))           # (B, L+2P, E)
    L = tokens.shape[1]
    conv = jnp.zeros((tokens.shape[0], L, C_OUT), jnp.float32)
    for k in range(KS):
        conv = conv + jnp.einsum('ble,oe->blo',
                                 x_pad[:, k:k + L, :], conv_w[:, :, k])
    conv = jax.nn.relu(conv + conv_b[None, None, :])
    pooled = jnp.max(conv, axis=1)                             # (B, C_OUT)
    return pooled @ fc_w.T + fc_b[None, :]


if __name__ == "__main__":
    # Small synthetic shapes consistent with the module.
    vocab_size, embed_dim, num_classes = 256, 32, 4
    batch, seq_len = 2, 16

    key = jax.random.PRNGKey(0)
    k_tok, k_emb, k_cw, k_cb, k_fw, k_fb = jax.random.split(key, 6)

    tokens = jax.random.randint(k_tok, (batch, seq_len), 0, vocab_size,
                                dtype=jnp.int32)
    emb_table = jax.random.normal(k_emb, (vocab_size, embed_dim),
                                  dtype=jnp.float32) * 0.1
    conv_w = jax.random.normal(k_cw, (C_OUT, embed_dim, KS),
                               dtype=jnp.float32) * 0.05
    conv_b = jax.random.normal(k_cb, (C_OUT,), dtype=jnp.float32) * 0.05
    fc_w = jax.random.normal(k_fw, (num_classes, C_OUT),
                             dtype=jnp.float32) * 0.05
    fc_b = jax.random.normal(k_fb, (num_classes,), dtype=jnp.float32) * 0.05

    out = cnn_classifier_forward(tokens, emb_table, conv_w, conv_b, fc_w, fc_b)
    out = jax.block_until_ready(out)

    ref = _reference_forward(tokens, emb_table, conv_w, conv_b, fc_w, fc_b)
    # bf16 conv inputs/weights (f32 accumulation, f32 FC) => relaxed tolerance.
    np.testing.assert_allclose(np.asarray(out), np.asarray(ref),
                               rtol=5e-2, atol=1e-2)
    print("KERNEL_OK")
</pallas_src>

<mosaic_0001>
module attributes {stable_mosaic.version = 11 : i64} {
  func.func @_cnn_kernel(%arg0: i32, %arg1: memref<256x160xbf16, #tpu.memory_space<vmem>>, %arg2: memref<160x128xbf16, #tpu.memory_space<vmem>>, %arg3: memref<1x128xf32, #tpu.memory_space<vmem>>, %arg4: memref<128x128xf32, #tpu.memory_space<vmem>>, %arg5: memref<1x128xf32, #tpu.memory_space<vmem>>, %arg6: memref<16x128xf32, #tpu.memory_space<vmem>>) attributes {dimension_semantics = [#tpu.dimension_semantics<parallel>], iteration_bounds = array<i64: 1>, scalar_prefetch = 0 : i64, scratch_operands = 0 : i64, tpu.core_type = #tpu.core_type<tc>, window_params = [{transform_indices = @transform_0, window_bounds = array<i64: 256, 160>}, {pipeline_mode = #tpu.pipeline_mode<synchronous>, transform_indices = @transform_1, window_bounds = array<i64: 160, 128>}, {pipeline_mode = #tpu.pipeline_mode<synchronous>, transform_indices = @transform_2, window_bounds = array<i64: 1, 128>}, {pipeline_mode = #tpu.pipeline_mode<synchronous>, transform_indices = @transform_3, window_bounds = array<i64: 128, 128>}, {pipeline_mode = #tpu.pipeline_mode<synchronous>, transform_indices = @transform_4, window_bounds = array<i64: 1, 128>}, {transform_indices = @transform_5, window_bounds = array<i64: 16, 128>}]} {
    %c0 = arith.constant 0 : index
    %c0_0 = arith.constant 0 : index
    %0 = vector.load %arg1[%c0, %c0_0] : memref<256x160xbf16, #tpu.memory_space<vmem>>, vector<256x160xbf16>
    %c0_1 = arith.constant 0 : index
    %c0_2 = arith.constant 0 : index
    %1 = vector.load %arg2[%c0_1, %c0_2] : memref<160x128xbf16, #tpu.memory_space<vmem>>, vector<160x128xbf16>
    %cst = arith.constant dense<0.000000e+00> : vector<256x128xf32>
    %2 = tpu.matmul %0, %1, %cst {dimension_numbers = #tpu.dot_dimension_numbers<[1], [0], [0], [1], [0, 0, 1, 1], [], []>} : vector<256x160xbf16>, vector<160x128xbf16>, vector<256x128xf32> -> vector<256x128xf32>
    %3 = vector.shape_cast %2 : vector<256x128xf32> to vector<16x16x128xf32>
    %cst_3 = arith.constant dense<0xFF800000> : vector<16x128xf32>
    %4 = vector.multi_reduction <maximumf>, %3, %cst_3 [1] : vector<16x16x128xf32> to vector<16x128xf32>
    %c0_4 = arith.constant 0 : index
    %c0_5 = arith.constant 0 : index
    %5 = vector.load %arg3[%c0_4, %c0_5] : memref<1x128xf32, #tpu.memory_space<vmem>>, vector<1x128xf32>
    %6 = vector.broadcast %5 : vector<1x128xf32> to vector<16x128xf32>
    %7 = arith.addf %4, %6 : vector<16x128xf32>
    %cst_6 = arith.constant 0.000000e+00 : f32
    %8 = vector.broadcast %cst_6 : f32 to vector<16x128xf32>
    %9 = arith.maximumf %7, %8 : vector<16x128xf32>
    %c0_7 = arith.constant 0 : index
    %c0_8 = arith.constant 0 : index
    %10 = vector.load %arg4[%c0_7, %c0_8] : memref<128x128xf32, #tpu.memory_space<vmem>>, vector<128x128xf32>
    %cst_9 = arith.constant dense<0.000000e+00> : vector<16x128xf32>
    %11 = tpu.matmul %9, %10, %cst_9 {dimension_numbers = #tpu.dot_dimension_numbers<[1], [0], [0], [1], [0, 0, 1, 1], [], []>} : vector<16x128xf32>, vector<128x128xf32>, vector<16x128xf32> -> vector<16x128xf32>
    %c0_10 = arith.constant 0 : index
    %c0_11 = arith.constant 0 : index
    %12 = vector.load %arg5[%c0_10, %c0_11] : memref<1x128xf32, #tpu.memory_space<vmem>>, vector<1x128xf32>
    %13 = vector.broadcast %12 : vector<1x128xf32> to vector<16x128xf32>
    %14 = arith.addf %11, %13 : vector<16x128xf32>
    %c0_12 = arith.constant 0 : index
    %c0_13 = arith.constant 0 : index
    %15 = vector.load %arg6[%c0_12, %c0_13] : memref<16x128xf32, #tpu.memory_space<vmem>>, vector<16x128xf32>
    tpu.vector_store %arg6[%c0_12, %c0_13], %14 {strides = array<i32>} : memref<16x128xf32, #tpu.memory_space<vmem>>, vector<16x128xf32>,
    return
  }
  func.func @transform_0(%arg0: i32) -> (i32, i32) {
    %c0_i32 = arith.constant 0 : i32
    %c0_i32_0 = arith.constant 0 : i32
    return %arg0, %c0_i32 : i32, i32
  }
  func.func @transform_1(%arg0: i32) -> (i32, i32) {
    %c0_i32 = arith.constant 0 : i32
    %c0_i32_0 = arith.constant 0 : i32
    %c0_i32_1 = arith.constant 0 : i32
    return %c0_i32, %c0_i32_0 : i32, i32
  }
  func.func @transform_2(%arg0: i32) -> (i32, i32) {
    %c0_i32 = arith.constant 0 : i32
    %c0_i32_0 = arith.constant 0 : i32
    %c0_i32_1 = arith.constant 0 : i32
    return %c0_i32, %c0_i32_0 : i32, i32
  }
  func.func @transform_3(%arg0: i32) -> (i32, i32) {
    %c0_i32 = arith.constant 0 : i32
    %c0_i32_0 = arith.constant 0 : i32
    %c0_i32_1 = arith.constant 0 : i32
    return %c0_i32, %c0_i32_0 : i32, i32
  }
  func.func @transform_4(%arg0: i32) -> (i32, i32) {
    %c0_i32 = arith.constant 0 : i32
    %c0_i32_0 = arith.constant 0 : i32
    %c0_i32_1 = arith.constant 0 : i32
    return %c0_i32, %c0_i32_0 : i32, i32
  }
  func.func @transform_5(%arg0: i32) -> (i32, i32) {
    %c0_i32 = arith.constant 0 : i32
    %c0_i32_0 = arith.constant 0 : i32
    return %arg0, %c0_i32 : i32, i32
  }
}

</mosaic_0001>

<llo_original>
// kernel: cnn_classifier_forward.1
$region0: #{cnn_classifier_forward.1}
  #allocation0 [shape = 'u32[]', space=smem, size = 0x4, offset = 0x4, fixed_abs, tag = 'smem constant byte address 0x4 - core index']
  #allocation1 [shape = 'u32[144,128]{1,0:T(1,128)}', space=vmem, size = 0x12000, scoped, tag = 'internal scratch']
  %s0 = inlined_call_operand.vmem [shape: bf16[256,160], index: 0, kind: input, shape index: {}]
  %s1 = inlined_call_operand.vmem [shape: bf16[160,128], index: 1, kind: input, shape index: {}]
  %s2 = inlined_call_operand.vmem [shape: f32[1,128], index: 2, kind: input, shape index: {}]
  %s3 = inlined_call_operand.vmem [shape: f32[128,128], index: 3, kind: input, shape index: {}]
  %s4 = inlined_call_operand.vmem [shape: f32[1,128], index: 4, kind: input, shape index: {}]
  %s5 = inlined_call_operand.vmem [shape: f32[16,128], index: 5, kind: output, shape index: {}]
  %s6 = sld [smem:[#allocation0]]
  $region30: #{cnn_classifier_forward.1} parent=0
    _
  %s8 = ssub.s32 1, %s6
  %s9 = scalar_select 0, %s8, %s6
  // Predicated region
  $region2: #{cnn_classifier_forward.1} parent=0 // pred_check
    _
  $region3: #{cnn_classifier_forward.1} parent=0 // pred_check_branch
    %11 = sbr.rel (0) target = $region5
  $region4: #{cnn_classifier_forward.1} parent=0 // pred_region
    _
  $region5: #{cnn_classifier_forward.1} parent=0 // pred_fallthru
    _
  // Predicated region
  $region6: #{cnn_classifier_forward.1} parent=0 // pred_check
    _
  $region7: #{cnn_classifier_forward.1} parent=0 // pred_check_branch
    %13 = sbr.rel (0) target = $region9
  $region8: #{cnn_classifier_forward.1} parent=0 // pred_region
    _
  $region9: #{cnn_classifier_forward.1} parent=0 // pred_fallthru
    _
  // Predicated region
  $region10: #{cnn_classifier_forward.1} parent=0 // pred_check
    _
  $region11: #{cnn_classifier_forward.1} parent=0 // pred_check_branch
    %15 = sbr.rel (0) target = $region13
  $region12: #{cnn_classifier_forward.1} parent=0 // pred_region
    _
  $region13: #{cnn_classifier_forward.1} parent=0 // pred_fallthru
    _
  // Predicated region
  $region14: #{cnn_classifier_forward.1} parent=0 // pred_check
    _
  $region15: #{cnn_classifier_forward.1} parent=0 // pred_check_branch
    %17 = sbr.rel (0) target = $region17
  $region16: #{cnn_classifier_forward.1} parent=0 // pred_region
    _
  $region17: #{cnn_classifier_forward.1} parent=0 // pred_fallthru
    _
  // Predicated region
  $region18: #{cnn_classifier_forward.1} parent=0 // pred_check
    _
  $region19: #{cnn_classifier_forward.1} parent=0 // pred_check_branch
    %19 = sbr.rel (0) target = $region21
  $region20: #{cnn_classifier_forward.1} parent=0 // pred_region
    _
  $region21: #{cnn_classifier_forward.1} parent=0 // pred_fallthru
    _
  %v21 = vld [vmem:[%s0] sm:$0xff]
  %v22 = vld [vmem:[%s0 + $0x8] sm:$0xff]
  %v23 = vld [vmem:[%s0 + $0x10] sm:$0xff]
  %v24 = vld [vmem:[%s0 + $0x18] sm:$0xff]
  %v25 = vld [vmem:[%s0 + $0x20] sm:$0xff]
  %v26 = vld [vmem:[%s0 + $0x28] sm:$0xff]
  %v27 = vld [vmem:[%s0 + $0x30] sm:$0xff]
  %v28 = vld [vmem:[%s0 + $0x38] sm:$0xff]
  %v29 = vld [vmem:[%s0 + $0x40] sm:$0xff]
  %v30 = vld [vmem:[%s0 + $0x48] sm:$0xff]
  %v31 = vld [vmem:[%s0 + $0x50] sm:$0xff]
  %v32 = vld [vmem:[%s0 + $0x58] sm:$0xff]
  %v33 = vld [vmem:[%s0 + $0x60] sm:$0xff]
  %v34 = vld [vmem:[%s0 + $0x68] sm:$0xff]
  %v35 = vld [vmem:[%s0 + $0x70] sm:$0xff]
  %v36 = vld [vmem:[%s0 + $0x78] sm:$0xff]
  %v37 = vld [vmem:[%s0 + $0x80] sm:$0xff]
  %v38 = vld [vmem:[%s0 + $0x88] sm:$0xff]
  %v39 = vld [vmem:[%s0 + $0x90] sm:$0xff]
  %v40 = vld [vmem:[%s0 + $0x98] sm:$0xff]
  %v41 = vld [vmem:[%s0 + $0xa0] sm:$0xff]
  %v42 = vld [vmem:[%s0 + $0xa8] sm:$0xff]
  %v43 = vld [vmem:[%s0 + $0xb0] sm:$0xff]
  %v44 = vld [vmem:[%s0 + $0xb8] sm:$0xff]
  %v45 = vld [vmem:[%s0 + $0xc0] sm:$0xff]
  %v46 = vld [vmem:[%s0 + $0xc8] sm:$0xff]
  %v47 = vld [vmem:[%s0 + $0xd0] sm:$0xff]
  %v48 = vld [vmem:[%s0 + $0xd8] sm:$0xff]
  %v49 = vld [vmem:[%s0 + $0xe0] sm:$0xff]
  %v50 = vld [vmem:[%s0 + $0xe8] sm:$0xff]
  %v51 = vld [vmem:[%s0 + $0xf0] sm:$0xff]
  %v52 = vld [vmem:[%s0 + $0xf8] sm:$0xff]
  %v53 = vld [vmem:[%s1] sm:$0xf]
  %v54 = vld [vmem:[%s1 + $0x4] sm:$0xf]
  %v55 = vld [vmem:[%s1 + $0x8] sm:$0xf]
  %v56 = vld [vmem:[%s1 + $0xc] sm:$0xf]
  %v57 = vld [vmem:[%s1 + $0x10] sm:$0xf]
  %v58 = vld [vmem:[%s1 + $0x14] sm:$0xf]
  %v59 = vld [vmem:[%s1 + $0x18] sm:$0xf]
  %v60 = vld [vmem:[%s1 + $0x1c] sm:$0xf]
  %v61 = vld [vmem:[%s1 + $0x20] sm:$0xf]
  %v62 = vld [vmem:[%s1 + $0x24] sm:$0xf]
  %v63 = vld [vmem:[%s1 + $0x28] sm:$0xf]
  %v64 = vld [vmem:[%s1 + $0x2c] sm:$0xf]
  %v65 = vld [vmem:[%s1 + $0x30] sm:$0xf]
  %v66 = vld [vmem:[%s1 + $0x34] sm:$0xf]
  %v67 = vld [vmem:[%s1 + $0x38] sm:$0xf]
  %v68 = vld [vmem:[%s1 + $0x3c] sm:$0xf]
  %v69 = vld [vmem:[%s1 + $0x40] sm:$0xf]
  %v70 = vld [vmem:[%s1 + $0x44] sm:$0xf]
  %v71 = vld [vmem:[%s1 + $0x48] sm:$0xf]
  %v72 = vld [vmem:[%s1 + $0x4c] sm:$0xf]
  %v105 = vunpack.c.l.b16 %v21
  %v106 = vunpack.c.h.b16 %v21
  %v107 = vunpack.c.l.b16 %v22
  %v108 = vunpack.c.h.b16 %v22
  %v109 = vunpack.c.l.b16 %v23
  %v110 = vunpack.c.h.b16 %v23
  %v111 = vunpack.c.l.b16 %v24
  %v112 = vunpack.c.h.b16 %v24
  %v113 = vunpack.c.l.b16 %v25
  %v114 = vunpack.c.h.b16 %v25
  %v115 = vunpack.c.l.b16 %v26
  %v116 = vunpack.c.h.b16 %v26
  %v117 = vunpack.c.l.b16 %v27
  %v118 = vunpack.c.h.b16 %v27
  %v119 = vunpack.c.l.b16 %v28
  %v120 = vunpack.c.h.b16 %v28
  %v121 = vunpack.c.l.b16 %v29
  %v122 = vunpack.c.h.b16 %v29
  %v123 = vunpack.c.l.b16 %v30
  %v124 = vunpack.c.h.b16 %v30
  %v125 = vunpack.c.l.b16 %v31
  %v126 = vunpack.c.h.b16 %v31
  %v127 = vunpack.c.l.b16 %v32
  %v128 = vunpack.c.h.b16 %v32
  %v129 = vunpack.c.l.b16 %v33
  %v130 = vunpack.c.h.b16 %v33
  %v131 = vunpack.c.l.b16 %v34
  %v132 = vunpack.c.h.b16 %v34
  %v133 = vunpack.c.l.b16 %v35
  %v134 = vunpack.c.h.b16 %v35
  %v135 = vunpack.c.l.b16 %v36
  %v136 = vunpack.c.h.b16 %v36
  %v137 = vunpack.c.l.b16 %v37
  %v138 = vunpack.c.h.b16 %v37
  %v139 = vunpack.c.l.b16 %v38
  %v140 = vunpack.c.h.b16 %v38
  %v141 = vunpack.c.l.b16 %v39
  %v142 = vunpack.c.h.b16 %v39
  %v143 = vunpack.c.l.b16 %v40
  %v144 = vunpack.c.h.b16 %v40
  %v145 = vunpack.c.l.b16 %v41
  %v146 = vunpack.c.h.b16 %v41
  %v147 = vunpack.c.l.b16 %v42
  %v148 = vunpack.c.h.b16 %v42
  %v149 = vunpack.c.l.b16 %v43
  %v150 = vunpack.c.h.b16 %v43
  %v151 = vunpack.c.l.b16 %v44
  %v152 = vunpack.c.h.b16 %v44
  %v153 = vunpack.c.l.b16 %v45
  %v154 = vunpack.c.h.b16 %v45
  %v155 = vunpack.c.l.b16 %v46
  %v156 = vunpack.c.h.b16 %v46
  %v157 = vunpack.c.l.b16 %v47
  %v158 = vunpack.c.h.b16 %v47
  %v159 = vunpack.c.l.b16 %v48
  %v160 = vunpack.c.h.b16 %v48
  %v161 = vunpack.c.l.b16 %v49
  %v162 = vunpack.c.h.b16 %v49
  %v163 = vunpack.c.l.b16 %v50
  %v164 = vunpack.c.h.b16 %v50
  %v165 = vunpack.c.l.b16 %v51
  %v166 = vunpack.c.h.b16 %v51
  %v167 = vunpack.c.l.b16 %v52
  %v168 = vunpack.c.h.b16 %v52
  %v169 = vpack.c.b16 %v107, %v105
  %v170 = vpack.c.b16 %v108, %v106
  %v171 = vpack.c.b16 %v111, %v109
  %v172 = vpack.c.b16 %v112, %v110
  %v173 = vpack.c.b16 %v115, %v113
  %v174 = vpack.c.b16 %v116, %v114
  %v175 = vpack.c.b16 %v119, %v117
  %v176 = vpack.c.b16 %v120, %v118
  %v177 = vpack.c.b16 %v123, %v121
  %v178 = vpack.c.b16 %v124, %v122
  %v179 = vpack.c.b16 %v127, %v125
  %v180 = vpack.c.b16 %v128, %v126
  %v181 = vpack.c.b16 %v131, %v129
  %v182 = vpack.c.b16 %v132, %v130
  %v183 = vpack.c.b16 %v135, %v133
  %v184 = vpack.c.b16 %v136, %v134
  %v185 = vpack.c.b16 %v139, %v137
  %v186 = vpack.c.b16 %v140, %v138
  %v187 = vpack.c.b16 %v143, %v141
  %v188 = vpack.c.b16 %v144, %v142
  %v189 = vpack.c.b16 %v147, %v145
  %v190 = vpack.c.b16 %v148, %v146
  %v191 = vpack.c.b16 %v151, %v149
  %v192 = vpack.c.b16 %v152, %v150
  %v193 = vpack.c.b16 %v155, %v153
  %v194 = vpack.c.b16 %v156, %v154
  %v195 = vpack.c.b16 %v159, %v157
  %v196 = vpack.c.b16 %v160, %v158
  %v197 = vpack.c.b16 %v163, %v161
  %v198 = vpack.c.b16 %v164, %v162
  %v199 = vpack.c.b16 %v167, %v165
  %v200 = vpack.c.b16 %v168, %v166
  %v237 = vunpack.c.l.b16 %v53
  %v238 = vunpack.c.l.b16 %v54
  %v239 = vunpack.c.l.b16 %v55
  %v240 = vunpack.c.l.b16 %v56
  %v241 = vunpack.c.l.b16 %v57
  %v242 = vunpack.c.l.b16 %v58
  %v243 = vunpack.c.l.b16 %v59
  %v244 = vunpack.c.l.b16 %v60
  %v245 = vunpack.c.l.b16 %v61
  %v246 = vunpack.c.l.b16 %v62
  %v247 = vunpack.c.l.b16 %v63
  %v248 = vunpack.c.l.b16 %v64
  %v249 = vunpack.c.l.b16 %v65
  %v250 = vunpack.c.l.b16 %v66
  %v251 = vunpack.c.l.b16 %v67
  %v252 = vunpack.c.l.b16 %v68
  %v253 = vunpack.c.l.b16 %v69
  %v254 = vunpack.c.l.b16 %v70
  %v255 = vunpack.c.l.b16 %v71
  %v256 = vunpack.c.l.b16 %v72
  %v257 = vpack.c.b16 %v238, %v237
  %v258 = vpack.c.b16 %v240, %v239
  %v259 = vpack.c.b16 %v242, %v241
  %v260 = vpack.c.b16 %v244, %v243
  %v261 = vpack.c.b16 %v246, %v245
  %v262 = vpack.c.b16 %v248, %v247
  %v263 = vpack.c.b16 %v250, %v249
  %v264 = vpack.c.b16 %v252, %v251
  %v265 = vpack.c.b16 %v254, %v253
  %v266 = vpack.c.b16 %v256, %v255
  %vm277 = vcmask 261120
  %v279 = vsel %vm277, %v170, 0
  %v282 = vsel %vm277, %v172, 0
  %v285 = vsel %vm277, %v174, 0
  %v288 = vsel %vm277, %v176, 0
  %v291 = vsel %vm277, %v178, 0
  %v294 = vsel %vm277, %v180, 0
  %v297 = vsel %vm277, %v182, 0
  %v300 = vsel %vm277, %v184, 0
  %v303 = vsel %vm277, %v186, 0
  %v306 = vsel %vm277, %v188, 0
  %v309 = vsel %vm277, %v190, 0
  %v312 = vsel %vm277, %v192, 0
  %v315 = vsel %vm277, %v194, 0
  %v318 = vsel %vm277, %v196, 0
  %v321 = vsel %vm277, %v198, 0
  %v324 = vsel %vm277, %v200, 0
  %326 = vmatprep.subr.bf16.mxu0 0
  %327 = vmatpush1.bf16.msra.mxu0 %v257
  %328 = vmatprep.subr.bf16.mxu0 0
  %329 = vmatpush1.bf16.msra.mxu0 %v258
  %330 = vmatprep.subr.bf16.mxu0 0
  %331 = vmatpush1.bf16.msra.mxu0 %v259
  %332 = vmatprep.subr.bf16.mxu0 0
  %333 = vmatpush1.bf16.msra.mxu0 %v260
  %334 = vmatprep.subr.bf16.mxu0 0
  %335 = vmatpush1.bf16.msra.mxu0 %v261
  %336 = vmatprep.subr.bf16.mxu0 0
  %337 = vmatpush1.bf16.msra.mxu0 %v262
  %338 = vmatprep.subr.bf16.mxu0 0
  %339 = vmatpush1.bf16.msra.mxu0 %v263
  %340 = vmatprep.subr.bf16.mxu0 0
  %341 = vmatpush1.bf16.msra.mxu0 %v264
  %342 = vmatprep.subr.bf16.mxu0 0
  %343 = vmatpush1.bf16.msra.mxu0 %v265
  %344 = vmatprep.subr.bf16.mxu0 0
  %345 = vmatpush1.bf16.msra.mxu0 %v266
  %346 = vmatprep.subr.bf16.mxu0 0
  %347 = vmatpush1.bf16.msra.mxu0 0
  %348 = vmatprep.subr.bf16.mxu0 0
  %349 = vmatpush1.bf16.msra.mxu0 0
  %350 = vmatprep.subr.bf16.mxu0 0
  %351 = vmatpush1.bf16.msra.mxu0 0
  %352 = vmatprep.subr.bf16.mxu0 0
  %353 = vmatpush1.bf16.msra.mxu0 0
  %354 = vmatprep.subr.bf16.mxu0 0
  %355 = vmatpush1.bf16.msra.mxu0 0
  %356 = vmatprep.subr.bf16.mxu0 0
  %357 = vmatpush1.bf16.msra.mxu0 0
  %358 = vmatprep.mubr.bf16.mxu0 %v279
  %359 = vmatmul.mubr.bf16.gmra.mrb[0].mxu0 %v169
  %v360 = vpop.f32.mrb[0].mxu0
  %v361 = vadd.f32 0.0, %v360
  %v362 = vpop.f32.mrb[0].mxu0
  %v363 = vpop.f32.mrb[0].mxu0
  %v364 = vadd.f32 0.0, %v363
  %v365 = vpop.f32.mrb[0].mxu0
  %366 = vmatprep.mubr.bf16.mxu0 %v282
  %367 = vmatmul.mubr.bf16.gmra.mrb[0].mxu0 %v171
  %v368 = vpop.f32.mrb[0].mxu0
  %v369 = vadd.f32 0.0, %v368
  %v370 = vpop.f32.mrb[0].mxu0
  %v371 = vpop.f32.mrb[0].mxu0
  %v372 = vadd.f32 0.0, %v371
  %v373 = vpop.f32.mrb[0].mxu0
  %374 = vmatprep.mubr.bf16.mxu0 %v285
  %375 = vmatmul.mubr.bf16.gmra.mrb[0].mxu0 %v173
  %v376 = vpop.f32.mrb[0].mxu0
  %v377 = vadd.f32 0.0, %v376
  %v378 = vpop.f32.mrb[0].mxu0
  %v379 = vpop.f32.mrb[0].mxu0
  %v380 = vadd.f32 0.0, %v379
  %v381 = vpop.f32.mrb[0].mxu0
  %382 = vmatprep.mubr.bf16.mxu0 %v288
  %383 = vmatmul.mubr.bf16.gmra.mrb[0].mxu0 %v175
  %v384 = vpop.f32.mrb[0].mxu0
  %v385 = vadd.f32 0.0, %v384
  %v386 = vpop.f32.mrb[0].mxu0
  %v387 = vpop.f32.mrb[0].mxu0
  %v388 = vadd.f32 0.0, %v387
  %v389 = vpop.f32.mrb[0].mxu0
  %390 = vmatprep.mubr.bf16.mxu0 %v291
  %391 = vmatmul.mubr.bf16.gmra.mrb[0].mxu0 %v177
  %v392 = vpop.f32.mrb[0].mxu0
  %v393 = vadd.f32 0.0, %v392
  %v394 = vpop.f32.mrb[0].mxu0
  %v395 = vpop.f32.mrb[0].mxu0
  %v396 = vadd.f32 0.0, %v395
  %v397 = vpop.f32.mrb[0].mxu0
  %398 = vmatprep.mubr.bf16.mxu0 %v294
  %399 = vmatmul.mubr.bf16.gmra.mrb[0].mxu0 %v179
  %v400 = vpop.f32.mrb[0].mxu0
  %v401 = vadd.f32 0.0, %v400
  %v402 = vpop.f32.mrb[0].mxu0
  %v403 = vpop.f32.mrb[0].mxu0
  %v404 = vadd.f32 0.0, %v403
  %v405 = vpop.f32.mrb[0].mxu0
  %406 = vmatprep.mubr.bf16.mxu0 %v297
  %407 = vmatmul.mubr.bf16.gmra.mrb[0].mxu0 %v181
  %v408 = vpop.f32.mrb[0].mxu0
  %v409 = vadd.f32 0.0, %v408
  %v410 = vpop.f32.mrb[0].mxu0
  %v411 = vpop.f32.mrb[0].mxu0
  %v412 = vadd.f32 0.0, %v411
  %v413 = vpop.f32.mrb[0].mxu0
  %414 = vmatprep.mubr.bf16.mxu0 %v300
  %415 = vmatmul.mubr.bf16.gmra.mrb[0].mxu0 %v183
  %v416 = vpop.f32.mrb[0].mxu0
  %v417 = vadd.f32 0.0, %v416
  %v418 = vpop.f32.mrb[0].mxu0
  %v419 = vpop.f32.mrb[0].mxu0
  %v420 = vadd.f32 0.0, %v419
  %v421 = vpop.f32.mrb[0].mxu0
  %422 = vmatprep.mubr.bf16.mxu0 %v303
  %423 = vmatmul.mubr.bf16.gmra.mrb[0].mxu0 %v185
  %v424 = vpop.f32.mrb[0].mxu0
  %v425 = vadd.f32 0.0, %v424
  %v426 = vpop.f32.mrb[0].mxu0
  %v427 = vpop.f32.mrb[0].mxu0
  %v428 = vadd.f32 0.0, %v427
  %v429 = vpop.f32.mrb[0].mxu0
  %430 = vmatprep.mubr.bf16.mxu0 %v306
  %431 = vmatmul.mubr.bf16.gmra.mrb[0].mxu0 %v187
  %v432 = vpop.f32.mrb[0].mxu0
  %v433 = vadd.f32 0.0, %v432
  %v434 = vpop.f32.mrb[0].mxu0
  %v435 = vpop.f32.mrb[0].mxu0
  %v436 = vadd.f32 0.0, %v435
  %v437 = vpop.f32.mrb[0].mxu0
  %438 = vmatprep.mubr.bf16.mxu0 %v309
  %439 = vmatmul.mubr.bf16.gmra.mrb[0].mxu0 %v189
  %v440 = vpop.f32.mrb[0].mxu0
  %v441 = vadd.f32 0.0, %v440
  %v442 = vpop.f32.mrb[0].mxu0
  %v443 = vpop.f32.mrb[0].mxu0
  %v444 = vadd.f32 0.0, %v443
  %v445 = vpop.f32.mrb[0].mxu0
  %446 = vmatprep.mubr.bf16.mxu0 %v312
  %447 = vmatmul.mubr.bf16.gmra.mrb[0].mxu0 %v191
  %v448 = vpop.f32.mrb[0].mxu0
  %v449 = vadd.f32 0.0, %v448
  %v450 = vpop.f32.mrb[0].mxu0
  %v451 = vpop.f32.mrb[0].mxu0
  %v452 = vadd.f32 0.0, %v451
  %v453 = vpop.f32.mrb[0].mxu0
  %454 = vmatprep.mubr.bf16.mxu0 %v315
  %455 = vmatmul.mubr.bf16.gmra.mrb[0].mxu0 %v193
  %v456 = vpop.f32.mrb[0].mxu0
  %v457 = vadd.f32 0.0, %v456
  %v458 = vpop.f32.mrb[0].mxu0
  %v459 = vpop.f32.mrb[0].mxu0
  %v460 = vadd.f32 0.0, %v459
  %v461 = vpop.f32.mrb[0].mxu0
  %462 = vmatprep.mubr.bf16.mxu0 %v318
  %463 = vmatmul.mubr.bf16.gmra.mrb[0].mxu0 %v195
  %v464 = vpop.f32.mrb[0].mxu0
  %v465 = vadd.f32 0.0, %v464
  %v466 = vpop.f32.mrb[0].mxu0
  %v467 = vpop.f32.mrb[0].mxu0
  %v468 = vadd.f32 0.0, %v467
  %v469 = vpop.f32.mrb[0].mxu0
  %470 = vmatprep.mubr.bf16.mxu0 %v321
  %471 = vmatmul.mubr.bf16.gmra.mrb[0].mxu0 %v197
  %v472 = vpop.f32.mrb[0].mxu0
  %v473 = vadd.f32 0.0, %v472
  %v474 = vpop.f32.mrb[0].mxu0
  %v475 = vpop.f32.mrb[0].mxu0
  %v476 = vadd.f32 0.0, %v475
  %v477 = vpop.f32.mrb[0].mxu0
  %478 = vmatprep.mubr.bf16.mxu0 %v324
  %479 = vmatmul.mubr.bf16.gmra.mrb[0].mxu0 %v199
  %v480 = vpop.f32.mrb[0].mxu0
  %v481 = vadd.f32 0.0, %v480
  %v482 = vpop.f32.mrb[0].mxu0
  %v483 = vpop.f32.mrb[0].mxu0
  %v484 = vadd.f32 0.0, %v483
  %v485 = vpop.f32.mrb[0].mxu0
  %486 = vdwg.mxu0
  %v487 = vmax.f32 %v361, %v364
  %v488 = vrot.slane %v487, 4
  %v489 = vmax.f32 %v487, %v488
  %v490 = vrot.slane %v489, 2
  %v491 = vmax.f32 %v489, %v490
  %v492 = vrot.slane %v491, 1
  %v493 = vmax.f32 %v491, %v492
  %v494 = vmax.f32 %v369, %v372
  %v495 = vrot.slane %v494, 4
  %v496 = vmax.f32 %v494, %v495
  %v497 = vrot.slane %v496, 2
  %v498 = vmax.f32 %v496, %v497
  %v499 = vrot.slane %v498, 1
  %v500 = vmax.f32 %v498, %v499
  %v501 = vmax.f32 %v377, %v380
  %v502 = vrot.slane %v501, 4
  %v503 = vmax.f32 %v501, %v502
  %v504 = vrot.slane %v503, 2
  %v505 = vmax.f32 %v503, %v504
  %v506 = vrot.slane %v505, 1
  %v507 = vmax.f32 %v505, %v506
  %v508 = vmax.f32 %v385, %v388
  %v509 = vrot.slane %v508, 4
  %v510 = vmax.f32 %v508, %v509
  %v511 = vrot.slane %v510, 2
  %v512 = vmax.f32 %v510, %v511
  %v513 = vrot.slane %v512, 1
  %v514 = vmax.f32 %v512, %v513
  %v515 = vmax.f32 %v393, %v396
  %v516 = vrot.slane %v515, 4
  %v517 = vmax.f32 %v515, %v516
  %v518 = vrot.slane %v517, 2
  %v519 = vmax.f32 %v517, %v518
  %v520 = vrot.slane %v519, 1
  %v521 = vmax.f32 %v519, %v520
  %v522 = vmax.f32 %v401, %v404
  %v523 = vrot.slane %v522, 4
  %v524 = vmax.f32 %v522, %v523
  %v525 = vrot.slane %v524, 2
  %v526 = vmax.f32 %v524, %v525
  %v527 = vrot.slane %v526, 1
  %v528 = vmax.f32 %v526, %v527
  %v529 = vmax.f32 %v409, %v412
  %v530 = vrot.slane %v529, 4
  %v531 = vmax.f32 %v529, %v530
  %v532 = vrot.slane %v531, 2
  %v533 = vmax.f32 %v531, %v532
  %v534 = vrot.slane %v533, 1
  %v535 = vmax.f32 %v533, %v534
  %v536 = vmax.f32 %v417, %v420
  %v537 = vrot.slane %v536, 4
  %v538 = vmax.f32 %v536, %v537
  %v539 = vrot.slane %v538, 2
  %v540 = vmax.f32 %v538, %v539
  %v541 = vrot.slane %v540, 1
  %v542 = vmax.f32 %v540, %v541
  %v543 = vmax.f32 %v425, %v428
  %v544 = vrot.slane %v543, 4
  %v545 = vmax.f32 %v543, %v544
  %v546 = vrot.slane %v545, 2
  %v547 = vmax.f32 %v545, %v546
  %v548 = vrot.slane %v547, 1
  %v549 = vmax.f32 %v547, %v548
  %v550 = vmax.f32 %v433, %v436
  %v551 = vrot.slane %v550, 4
  %v552 = vmax.f32 %v550, %v551
  %v553 = vrot.slane %v552, 2
  %v554 = vmax.f32 %v552, %v553
  %v555 = vrot.slane %v554, 1
  %v556 = vmax.f32 %v554, %v555
  %v557 = vmax.f32 %v441, %v444
  %v558 = vrot.slane %v557, 4
  %v559 = vmax.f32 %v557, %v558
  %v560 = vrot.slane %v559, 2
  %v561 = vmax.f32 %v559, %v560
  %v562 = vrot.slane %v561, 1
  %v563 = vmax.f32 %v561, %v562
  %v564 = vmax.f32 %v449, %v452
  %v565 = vrot.slane %v564, 4
  %v566 = vmax.f32 %v564, %v565
  %v567 = vrot.slane %v566, 2
  %v568 = vmax.f32 %v566, %v567
  %v569 = vrot.slane %v568, 1
  %v570 = vmax.f32 %v568, %v569
  %v571 = vmax.f32 %v457, %v460
  %v572 = vrot.slane %v571, 4
  %v573 = vmax.f32 %v571, %v572
  %v574 = vrot.slane %v573, 2
  %v575 = vmax.f32 %v573, %v574
  %v576 = vrot.slane %v575, 1
  %v577 = vmax.f32 %v575, %v576
  %v578 = vmax.f32 %v465, %v468
  %v579 = vrot.slane %v578, 4
  %v580 = vmax.f32 %v578, %v579
  %v581 = vrot.slane %v580, 2
  %v582 = vmax.f32 %v580, %v581
  %v583 = vrot.slane %v582, 1
  %v584 = vmax.f32 %v582, %v583
  %v585 = vmax.f32 %v473, %v476
  %v586 = vrot.slane %v585, 4
  %v587 = vmax.f32 %v585, %v586
  %v588 = vrot.slane %v587, 2
  %v589 = vmax.f32 %v587, %v588
  %v590 = vrot.slane %v589, 1
  %v591 = vmax.f32 %v589, %v590
  %v592 = vmax.f32 %v481, %v484
  %v593 = vrot.slane %v592, 4
  %v594 = vmax.f32 %v592, %v593
  %v595 = vrot.slane %v594, 2
  %v596 = vmax.f32 %v594, %v595
  %v597 = vrot.slane %v596, 1
  %v598 = vmax.f32 %v596, %v597
  %v599 = vld [vmem:[%s2] sm:$0x1]
  %v601 = vlaneseq
  %v602 = vshrl.u32 %v601, 7
  %v603 = vsub.s32 0, %v602
  %v604 = vrot.slane %v599, %v603
  %v606 = vadd.f32 %v493, %v604
  %v607 = vadd.f32 %v500, %v604
  %v608 = vadd.f32 %v507, %v604
  %v609 = vadd.f32 %v514, %v604
  %v610 = vadd.f32 %v521, %v604
  %v611 = vadd.f32 %v528, %v604
  %v612 = vadd.f32 %v535, %v604
  %v613 = vadd.f32 %v542, %v604
  %v614 = vadd.f32 %v549, %v604
  %v615 = vadd.f32 %v556, %v604
  %v616 = vadd.f32 %v563, %v604
  %v617 = vadd.f32 %v570, %v604
  %v618 = vadd.f32 %v577, %v604
  %v619 = vadd.f32 %v584, %v604
  %v620 = vadd.f32 %v591, %v604
  %v621 = vadd.f32 %v598, %v604
  %v622 = vmax.f32 %v606, 0.0
  %v623 = vmax.f32 %v607, 0.0
  %v624 = vmax.f32 %v608, 0.0
  %v625 = vmax.f32 %v609, 0.0
  %v626 = vmax.f32 %v610, 0.0
  %v627 = vmax.f32 %v611, 0.0
  %v628 = vmax.f32 %v612, 0.0
  %v629 = vmax.f32 %v613, 0.0
  %v630 = vmax.f32 %v614, 0.0
  %v631 = vmax.f32 %v615, 0.0
  %v632 = vmax.f32 %v616, 0.0
  %v633 = vmax.f32 %v617, 0.0
  %v634 = vmax.f32 %v618, 0.0
  %v635 = vmax.f32 %v619, 0.0
  %v636 = vmax.f32 %v620, 0.0
  %v637 = vmax.f32 %v621, 0.0
  %v638 = vld [vmem:[%s3] sm:$0xff]
  %v639 = vld [vmem:[%s3 + $0x8] sm:$0xff]
  %v640 = vld [vmem:[%s3 + $0x10] sm:$0xff]
  %v641 = vld [vmem:[%s3 + $0x18] sm:$0xff]
  %v642 = vld [vmem:[%s3 + $0x20] sm:$0xff]
  %v643 = vld [vmem:[%s3 + $0x28] sm:$0xff]
  %v644 = vld [vmem:[%s3 + $0x30] sm:$0xff]
  %v645 = vld [vmem:[%s3 + $0x38] sm:$0xff]
  %v646 = vld [vmem:[%s3 + $0x40] sm:$0xff]
  %v647 = vld [vmem:[%s3 + $0x48] sm:$0xff]
  %v648 = vld [vmem:[%s3 + $0x50] sm:$0xff]
  %v649 = vld [vmem:[%s3 + $0x58] sm:$0xff]
  %v650 = vld [vmem:[%s3 + $0x60] sm:$0xff]
  %v651 = vld [vmem:[%s3 + $0x68] sm:$0xff]
  %v652 = vld [vmem:[%s3 + $0x70] sm:$0xff]
  %v653 = vld [vmem:[%s3 + $0x78] sm:$0xff]
  %v654 = vld [vmem:[%s4] sm:$0x1]
  %v656 = vlaneseq
  %v657 = vshrl.u32 %v656, 7
  %v658 = vsub.s32 0, %v657
  %v659 = vrot.slane %v654, %v658
  %v677 = vrot.slane %v623, 7
  %vm678 = vcmask 1041409
  %v679 = vsel %vm678, %v677, %v622
  %v680 = vrot.slane %v624, 6
  %vm681 = vcmask 1042434
  %v682 = vsel %vm681, %v680, %v679
  %v683 = vrot.slane %v625, 5
  %vm684 = vcmask 1043459
  %v685 = vsel %vm684, %v683, %v682
  %v686 = vrot.slane %v626, 4
  %vm687 = vcmask 1044484
  %v688 = vsel %vm687, %v686, %v685
  %v689 = vrot.slane %v627, 3
  %vm690 = vcmask 1045509
  %v691 = vsel %vm690, %v689, %v688
  %v692 = vrot.slane %v628, 2
  %vm693 = vcmask 1046534
  %v694 = vsel %vm693, %v692, %v691
  %v695 = vrot.slane %v629, 1
  %vm696 = vcmask 1047559
  %v697 = vsel %vm696, %v695, %v694
  %v698 = vrot.slane %v631, 7
  %v699 = vsel %vm678, %v698, %v630
  %v700 = vrot.slane %v632, 6
  %v701 = vsel %vm681, %v700, %v699
  %v702 = vrot.slane %v633, 5
  %v703 = vsel %vm684, %v702, %v701
  %v704 = vrot.slane %v634, 4
  %v705 = vsel %vm687, %v704, %v703
  %v706 = vrot.slane %v635, 3
  %v707 = vsel %vm690, %v706, %v705
  %v708 = vrot.slane %v636, 2
  %v709 = vsel %vm693, %v708, %v707
  %v710 = vrot.slane %v637, 1
  %v711 = vsel %vm696, %v710, %v709
  %714 = vmatprep.subr.mxu0 0.0
  %715 = vmatpush1.msra.mxu0 %v638
  %716 = vmatprep.subr.mxu0 0.0
  %717 = vmatpush1.msra.mxu0 %v639
  %718 = vmatprep.subr.mxu0 0.0
  %719 = vmatpush1.msra.mxu0 %v640
  %720 = vmatprep.subr.mxu0 0.0
  %721 = vmatpush1.msra.mxu0 %v641
  %722 = vmatprep.subr.mxu0 0.0
  %723 = vmatpush1.msra.mxu0 %v642
  %724 = vmatprep.subr.mxu0 0.0
  %725 = vmatpush1.msra.mxu0 %v643
  %726 = vmatprep.subr.mxu0 0.0
  %727 = vmatpush1.msra.mxu0 %v644
  %728 = vmatprep.subr.mxu0 0.0
  %729 = vmatpush1.msra.mxu0 %v645
  %730 = vmatprep.subr.mxu0 0.0
  %731 = vmatpush1.msra.mxu0 %v646
  %732 = vmatprep.subr.mxu0 0.0
  %733 = vmatpush1.msra.mxu0 %v647
  %734 = vmatprep.subr.mxu0 0.0
  %735 = vmatpush1.msra.mxu0 %v648
  %736 = vmatprep.subr.mxu0 0.0
  %737 = vmatpush1.msra.mxu0 %v649
  %738 = vmatprep.subr.mxu0 0.0
  %739 = vmatpush1.msra.mxu0 %v650
  %740 = vmatprep.subr.mxu0 0.0
  %741 = vmatpush1.msra.mxu0 %v651
  %742 = vmatprep.subr.mxu0 0.0
  %743 = vmatpush1.msra.mxu0 %v652
  %744 = vmatprep.subr.mxu0 0.0
  %745 = vmatpush1.msra.mxu0 %v653
  %746 = vmatprep.subr.mxu0 0.0
  %747 = vmatpush1.msra.mxu0 0.0
  %748 = vmatprep.subr.mxu0 0.0
  %749 = vmatpush1.msra.mxu0 0.0
  %750 = vmatprep.subr.mxu0 0.0
  %751 = vmatpush1.msra.mxu0 0.0
  %752 = vmatprep.subr.mxu0 0.0
  %753 = vmatpush1.msra.mxu0 0.0
  %754 = vmatprep.subr.mxu0 0.0
  %755 = vmatpush1.msra.mxu0 0.0
  %756 = vmatprep.subr.mxu0 0.0
  %757 = vmatpush1.msra.mxu0 0.0
  %758 = vmatprep.subr.mxu0 0.0
  %759 = vmatpush1.msra.mxu0 0.0
  %760 = vmatprep.subr.mxu0 0.0
  %761 = vmatpush1.msra.mxu0 0.0
  %762 = vmatprep.subr.mxu0 0.0
  %763 = vmatpush1.msra.mxu0 0.0
  %764 = vmatprep.subr.mxu0 0.0
  %765 = vmatpush1.msra.mxu0 0.0
  %766 = vmatprep.subr.mxu0 0.0
  %767 = vmatpush1.msra.mxu0 0.0
  %768 = vmatprep.subr.mxu0 0.0
  %769 = vmatpush1.msra.mxu0 0.0
  %770 = vmatprep.subr.mxu0 0.0
  %771 = vmatpush1.msra.mxu0 0.0
  %772 = vmatprep.subr.mxu0 0.0
  %773 = vmatpush1.msra.mxu0 0.0
  %774 = vmatprep.subr.mxu0 0.0
  %775 = vmatpush1.msra.mxu0 0.0
  %776 = vmatprep.subr.mxu0 0.0
  %777 = vmatpush1.msra.mxu0 0.0
  %778 = vmatprep.mubr.f32.mxu0 0.0
  %779 = vmatmul.mubr.f32.gmra.mrb[0].mxu0 %v697
  %v780 = vpop.f32.mrb[0].mxu0
  %v781 = vadd.f32 %v659, %v780
  %v782 = vpop.f32.mrb[0].mxu0
  %783 = vmatprep.mubr.f32.mxu0 0.0
  %784 = vmatmul.mubr.f32.gmra.mrb[0].mxu0 %v711
  %v785 = vpop.f32.mrb[0].mxu0
  %v786 = vadd.f32 %v659, %v785
  %v787 = vpop.f32.mrb[0].mxu0
  %788 = vdwg.mxu0
  %789 = vst [vmem:[%s5] sm:$0xff] %v781
  %790 = vst [vmem:[%s5 + $0x8] sm:$0xff] %v786
  // Predicated region
  $region22: #{cnn_classifier_forward.1} parent=0 // pred_check
    _
  $region23: #{cnn_classifier_forward.1} parent=0 // pred_check_branch
    %792 = sbr.rel (0) target = $region25
  $region24: #{cnn_classifier_forward.1} parent=0 // pred_region
    _
  $region25: #{cnn_classifier_forward.1} parent=0 // pred_fallthru
    _
  // Predicated region
  $region26: #{cnn_classifier_forward.1} parent=0 // pred_check
    _
  $region27: #{cnn_classifier_forward.1} parent=0 // pred_check_branch
    %794 = sbr.rel (0) target = $region29
  $region28: #{cnn_classifier_forward.1} parent=0 // pred_region
    _
  $region29: #{cnn_classifier_forward.1} parent=0 // pred_fallthru
    _

</llo_original>
